<compile_context>
chip_gen: v5e
topology: v5e:2x2
jax: 0.10.0
libtpu: 0.0.40
codegen_flags: <defaults>
</compile_context>

<pallas_src>
import math

import jax
import jax.numpy as jnp
from jax import lax
from jax.experimental import pallas as pl
from jax.experimental.pallas import tpu as pltpu


def _round_up(a, b):
    return (a + b - 1) // b * b


def _krr_predict_kernel(ninvg_ref, x_ref, y_ref, b_ref, y2_ref, o_ref, x2_ref):
    # ninvg_ref : SMEM scalar-prefetch ref, shape (1,)  -- -1/g
    # x_ref     : (tm, D)  tile of test points
    # y_ref     : (tn, D)  tile of train points
    # b_ref     : (1, tn)  tile of alphas (row layout, lane-dense)
    # y2_ref    : (1, tn)  tile of precomputed ||train_j||^2
    # o_ref     : (1, tm)  output tile (lane-dense, resident across j axis)
    # x2_ref    : (tm, 1)  f32 VMEM scratch holding ||x_i||^2 for this i-row
    j = pl.program_id(1)

    x = x_ref[...]                                              # (tm, D) f32

    @pl.when(j == 0)
    def _():
        o_ref[...] = jnp.zeros_like(o_ref)
        x2_ref[...] = jnp.sum(x * x, axis=-1, keepdims=True)    # (tm, 1)

    y = y_ref[...]                                              # (tn, D) f32

    # x . y^T on the MXU (contract over D, no explicit transpose)
    xy = lax.dot_general(x, y, (((1,), (1,)), ((), ())),
                         preferred_element_type=jnp.float32)    # (tm, tn)
    sqd = x2_ref[...] + y2_ref[...] - 2.0 * xy                  # (tm, tn)

    # exp(-sqd / g) == exp(sqd * (-1/g)): one EUP op per element, no divide.
    kmat = jnp.exp(sqd * ninvg_ref[0])                          # (tm, tn)

    # out_row (1, tm) += b_row (1, tn) contracted with kmat (tm, tn) over tn.
    o_ref[...] += lax.dot_general(b_ref[...], kmat,
                                  (((1,), (1,)), ((), ())),
                                  preferred_element_type=jnp.float32)


def krr_predict(X, train, alphas, g, *, tm=512, tn=1024):
    """Pallas implementation of KRRGenredSolver.forward.

    out[i, 0] = sum_j exp(-||X[i]-train[j]||^2 / g) * alphas[j, 0]
    """
    M, D = X.shape
    N, Dt = train.shape
    assert D == Dt and alphas.shape == (N, 1)

    X = X.astype(jnp.float32)
    train = train.astype(jnp.float32)
    alphas = alphas.astype(jnp.float32)

    # Cap tiles to the (128-aligned) problem size, then pad to full tiles.
    tm = max(128, min(tm, _round_up(M, 128)))
    tn = max(128, min(tn, _round_up(N, 128)))
    M_pad = _round_up(M, tm)
    N_pad = _round_up(N, tn)

    X_p = jnp.pad(X, ((0, M_pad - M), (0, 0)))
    train_p = jnp.pad(train, ((0, N_pad - N), (0, 0)))
    # Padded alphas are exactly zero -> padded train columns contribute 0.
    b_row = jnp.pad(alphas[:, 0], (0, N_pad - N)).reshape(1, N_pad)
    y2_row = jnp.sum(train_p * train_p, axis=1).reshape(1, N_pad)

    neg_inv_g = (-1.0 / jnp.asarray(g, jnp.float32)).reshape((1,))

    grid_spec = pltpu.PrefetchScalarGridSpec(
        num_scalar_prefetch=1,
        grid=(M_pad // tm, N_pad // tn),
        in_specs=[
            pl.BlockSpec((tm, D), lambda i, j, s: (i, 0)),   # X tile
            pl.BlockSpec((tn, D), lambda i, j, s: (j, 0)),   # train tile
            pl.BlockSpec((1, tn), lambda i, j, s: (0, j)),   # alphas row
            pl.BlockSpec((1, tn), lambda i, j, s: (0, j)),   # ||train||^2 row
        ],
        out_specs=pl.BlockSpec((1, tm), lambda i, j, s: (0, i)),
        scratch_shapes=[pltpu.VMEM((tm, 1), jnp.float32)],
    )

    out_row = pl.pallas_call(
        _krr_predict_kernel,
        out_shape=jax.ShapeDtypeStruct((1, M_pad), jnp.float32),
        grid_spec=grid_spec,
        compiler_params=pltpu.CompilerParams(
            dimension_semantics=("parallel", "arbitrary")),
    )(neg_inv_g, X_p, train_p, b_row, y2_row)

    return out_row[0, :M].reshape(M, 1)


def krr_fit(X, Y, penalty, g):
    """Plain-JAX glue reproducing KernelSolve: solve (alpha*I + K) b = Y.

    alpha = penalty * N (matches `variance = self.penalty * X.shape[0]`).
    """
    N = X.shape[0]
    alpha = penalty * N
    sqd = (jnp.sum(X * X, axis=1, keepdims=True)
           + jnp.sum(X * X, axis=1)[None, :]
           - 2.0 * X @ X.T)
    K = jnp.exp(-sqd / g)
    return jnp.linalg.solve(K + alpha * jnp.eye(N, dtype=X.dtype), Y)


def krr_predict_ref(X, train, alphas, g):
    sqd = (jnp.sum(X * X, axis=1, keepdims=True)
           + jnp.sum(train * train, axis=1)[None, :]
           - 2.0 * X @ train.T)
    return jnp.exp(-sqd / g) @ alphas


if __name__ == "__main__":
    # Small, deterministic shapes consistent with the module (dim=32 default).
    dim = 32
    n_train = 32
    n_test = 32
    sigma = 1.0
    penalty = 1e-3
    g = 2.0 * sigma ** 2          # self.sigma = 2 * sigma**2 in the module

    key = jax.random.PRNGKey(0)
    kx, ky, kt = jax.random.split(key, 3)
    X_train = jax.random.normal(kx, (n_train, dim), dtype=jnp.float32)
    Y_train = jax.random.normal(ky, (n_train, 1), dtype=jnp.float32)
    X_test = jax.random.normal(kt, (n_test, dim), dtype=jnp.float32)

    # fit() — glue (KeOps conjugate-gradient solve replaced by a direct solve)
    alphas = krr_fit(X_train, Y_train, penalty, g)

    # forward() — Pallas kernel
    out = krr_predict(X_test, X_train, alphas, g)
    out = jax.block_until_ready(out)

    ref = krr_predict_ref(X_test, X_train, alphas, g)
    assert out.shape == (n_test, 1)
    assert jnp.allclose(out, ref, atol=1e-4, rtol=1e-4), (
        f"max abs err {jnp.max(jnp.abs(out - ref))}")

    print("KERNEL_OK")
</pallas_src>

<mosaic_0001>
module attributes {stable_mosaic.version = 11 : i64} {
  func.func @_krr_predict_kernel(%arg0: i32, %arg1: i32, %arg2: memref<1xf32, #tpu.memory_space<smem>>, %arg3: memref<128x32xf32, #tpu.memory_space<vmem>>, %arg4: memref<128x32xf32, #tpu.memory_space<vmem>>, %arg5: memref<1x128xf32, #tpu.memory_space<vmem>>, %arg6: memref<1x128xf32, #tpu.memory_space<vmem>>, %arg7: memref<1x128xf32, #tpu.memory_space<vmem>>, %arg8: memref<128x1xf32, #tpu.memory_space<vmem>>) attributes {dimension_semantics = [#tpu.dimension_semantics<parallel>, #tpu.dimension_semantics<arbitrary>], iteration_bounds = array<i64: 1, 1>, scalar_prefetch = 1 : i64, scratch_operands = 1 : i64, tpu.core_type = #tpu.core_type<tc>, window_params = [{transform_indices = @transform_0, window_bounds = array<i64: 128, 32>}, {transform_indices = @transform_1, window_bounds = array<i64: 128, 32>}, {transform_indices = @transform_2, window_bounds = array<i64: 1, 128>}, {transform_indices = @transform_3, window_bounds = array<i64: 1, 128>}, {transform_indices = @transform_4, window_bounds = array<i64: 1, 128>}]} {
    %c0 = arith.constant 0 : index
    %c0_0 = arith.constant 0 : index
    %0 = vector.load %arg3[%c0, %c0_0] : memref<128x32xf32, #tpu.memory_space<vmem>>, vector<128x32xf32>
    %c0_i32 = arith.constant 0 : i32
    %1 = arith.cmpi eq, %arg1, %c0_i32 : i32
    %2 = arith.extui %1 : i1 to i32
    %c0_i32_1 = arith.constant 0 : i32
    %3 = arith.cmpi ne, %2, %c0_i32_1 : i32
    scf.if %3 {
      %cst_17 = arith.constant 0.000000e+00 : f32
      %23 = vector.broadcast %cst_17 : f32 to vector<1x128xf32>
      %c0_18 = arith.constant 0 : index
      %c0_19 = arith.constant 0 : index
      %24 = vector.load %arg7[%c0_18, %c0_19] : memref<1x128xf32, #tpu.memory_space<vmem>>, vector<1x128xf32>
      tpu.vector_store %arg7[%c0_18, %c0_19], %23 {strides = array<i32>} : memref<1x128xf32, #tpu.memory_space<vmem>>, vector<1x128xf32>,
      %25 = arith.mulf %0, %0 : vector<128x32xf32>
      %cst_20 = arith.constant dense<0.000000e+00> : vector<128xf32>
      %26 = vector.multi_reduction <add>, %25, %cst_20 [1] : vector<128x32xf32> to vector<128xf32>
      %27 = vector.shape_cast %26 : vector<128xf32> to vector<128x1xf32>
      %c0_21 = arith.constant 0 : index
      %c0_22 = arith.constant 0 : index
      %28 = vector.load %arg8[%c0_21, %c0_22] : memref<128x1xf32, #tpu.memory_space<vmem>>, vector<128x1xf32>
      tpu.vector_store %arg8[%c0_21, %c0_22], %27 {strides = array<i32>} : memref<128x1xf32, #tpu.memory_space<vmem>>, vector<128x1xf32>,
    } else {
    }
    %c0_2 = arith.constant 0 : index
    %c0_3 = arith.constant 0 : index
    %4 = vector.load %arg4[%c0_2, %c0_3] : memref<128x32xf32, #tpu.memory_space<vmem>>, vector<128x32xf32>
    %cst = arith.constant dense<0.000000e+00> : vector<128x128xf32>
    %5 = tpu.matmul %0, %4, %cst {dimension_numbers = #tpu.dot_dimension_numbers<[1], [1], [0], [0], [0, 0, 1, 0], [], []>} : vector<128x32xf32>, vector<128x32xf32>, vector<128x128xf32> -> vector<128x128xf32>
    %c0_4 = arith.constant 0 : index
    %c0_5 = arith.constant 0 : index
    %6 = vector.load %arg8[%c0_4, %c0_5] : memref<128x1xf32, #tpu.memory_space<vmem>>, vector<128x1xf32>
    %c0_6 = arith.constant 0 : index
    %c0_7 = arith.constant 0 : index
    %7 = vector.load %arg6[%c0_6, %c0_7] : memref<1x128xf32, #tpu.memory_space<vmem>>, vector<1x128xf32>
    %8 = vector.broadcast %6 : vector<128x1xf32> to vector<128x128xf32>
    %9 = vector.broadcast %7 : vector<1x128xf32> to vector<128x128xf32>
    %10 = arith.addf %8, %9 : vector<128x128xf32>
    %cst_8 = arith.constant 2.000000e+00 : f32
    %11 = vector.broadcast %cst_8 : f32 to vector<128x128xf32>
    %12 = arith.mulf %11, %5 : vector<128x128xf32>
    %13 = arith.subf %10, %12 : vector<128x128xf32>
    %c0_9 = arith.constant 0 : index
    %14 = memref.load %arg2[%c0_9] : memref<1xf32, #tpu.memory_space<smem>>
    %15 = vector.broadcast %14 : f32 to vector<128x128xf32>
    %16 = arith.mulf %13, %15 : vector<128x128xf32>
    %17 = math.exp %16 : vector<128x128xf32>
    %c0_10 = arith.constant 0 : index
    %c0_11 = arith.constant 0 : index
    %18 = vector.load %arg7[%c0_10, %c0_11] : memref<1x128xf32, #tpu.memory_space<vmem>>, vector<1x128xf32>
    %c0_12 = arith.constant 0 : index
    %c0_13 = arith.constant 0 : index
    %19 = vector.load %arg5[%c0_12, %c0_13] : memref<1x128xf32, #tpu.memory_space<vmem>>, vector<1x128xf32>
    %cst_14 = arith.constant dense<0.000000e+00> : vector<1x128xf32>
    %20 = tpu.matmul %19, %17, %cst_14 {dimension_numbers = #tpu.dot_dimension_numbers<[1], [1], [0], [0], [0, 0, 1, 0], [], []>} : vector<1x128xf32>, vector<128x128xf32>, vector<1x128xf32> -> vector<1x128xf32>
    %21 = arith.addf %18, %20 : vector<1x128xf32>
    %c0_15 = arith.constant 0 : index
    %c0_16 = arith.constant 0 : index
    %22 = vector.load %arg7[%c0_15, %c0_16] : memref<1x128xf32, #tpu.memory_space<vmem>>, vector<1x128xf32>
    tpu.vector_store %arg7[%c0_15, %c0_16], %21 {strides = array<i32>} : memref<1x128xf32, #tpu.memory_space<vmem>>, vector<1x128xf32>,
    return
  }
  func.func @transform_0(%arg0: i32, %arg1: i32, %arg2: memref<1xf32, #tpu.memory_space<smem>>) -> (i32, i32) {
    %c0_i32 = arith.constant 0 : i32
    %c0_i32_0 = arith.constant 0 : i32
    return %arg0, %c0_i32 : i32, i32
  }
  func.func @transform_1(%arg0: i32, %arg1: i32, %arg2: memref<1xf32, #tpu.memory_space<smem>>) -> (i32, i32) {
    %c0_i32 = arith.constant 0 : i32
    %c0_i32_0 = arith.constant 0 : i32
    return %arg1, %c0_i32 : i32, i32
  }
  func.func @transform_2(%arg0: i32, %arg1: i32, %arg2: memref<1xf32, #tpu.memory_space<smem>>) -> (i32, i32) {
    %c0_i32 = arith.constant 0 : i32
    %c0_i32_0 = arith.constant 0 : i32
    return %c0_i32, %arg1 : i32, i32
  }
  func.func @transform_3(%arg0: i32, %arg1: i32, %arg2: memref<1xf32, #tpu.memory_space<smem>>) -> (i32, i32) {
    %c0_i32 = arith.constant 0 : i32
    %c0_i32_0 = arith.constant 0 : i32
    return %c0_i32, %arg1 : i32, i32
  }
  func.func @transform_4(%arg0: i32, %arg1: i32, %arg2: memref<1xf32, #tpu.memory_space<smem>>) -> (i32, i32) {
    %c0_i32 = arith.constant 0 : i32
    %c0_i32_0 = arith.constant 0 : i32
    return %c0_i32, %arg0 : i32, i32
  }
}

</mosaic_0001>

<llo_original>
// kernel: tpu_custom_call.1
$region0: #{tpu_custom_call.1}
  #allocation0 [shape = 'u32[]', space=smem, size = 0x4, offset = 0x4, fixed_abs, tag = 'smem constant byte address 0x4 - core index']
  #allocation1 [shape = 'u32[72,128]{1,0:T(1,128)}', space=vmem, size = 0x9000, scoped, tag = 'internal scratch']
  #allocation2 [shape = 'f32[128,1]{1,0:T(8,128)}', space=vmem, size = 0x10000, scoped, tag = 'scratch operand']
  #allocation3 [shape = 's32[1]{0}', space=sflag, size = 0x4, scoped, tag = 'scoped memory for tpu_custom_call.1']
  #allocation4 [shape = 'f32[1]{0:T(128)S(6)}', space=smem, size = 0x200, scoped, tag = 'prefetched SMEM operand 0']
  %s0 = inlined_call_operand.<no memory space> [shape: f32[1], index: 0, kind: input, shape index: {}]
  %s1 = inlined_call_operand.vmem [shape: f32[128,32], index: 1, kind: input, shape index: {}]
  %s2 = inlined_call_operand.vmem [shape: f32[128,32], index: 2, kind: input, shape index: {}]
  %s3 = inlined_call_operand.vmem [shape: f32[1,128], index: 3, kind: input, shape index: {}]
  %s4 = inlined_call_operand.vmem [shape: f32[1,128], index: 4, kind: input, shape index: {}]
  %s5 = inlined_call_operand.hbm [shape: f32[1,128], index: 5, kind: output, shape index: {}]
  %s6 = sld [smem:[#allocation0]]
  $region30: #{tpu_custom_call.1} parent=0
    _
  %s8 = ssub.s32 1, %s6
  %s9 = scalar_select 0, %s8, %s6
  %10 = sst [smem:[#allocation4]] %s0
  $region1: #{tpu_custom_call.1} parent=0
    #allocation5 [shape = 'u8[512]{0}', space=vmem, size = 0x400, scoped, tag = 'output window, operand 0, single buffered']
    #allocation6 [shape = 's32[1]{0}', space=sflag, size = 0x4, scoped, tag = 'scoped memory for tpu_custom_call.1']
    %11 = vsyncpa [#allocation6], 0
    // Predicated region
    $region2: #{tpu_custom_call.1} parent=1 // pred_check
      _
    $region3: #{tpu_custom_call.1} parent=1 // pred_check_branch
      %13 = sbr.rel (0) target = $region5
    $region4: #{tpu_custom_call.1} parent=1 // pred_region
      _
    $region5: #{tpu_custom_call.1} parent=1 // pred_fallthru
      _
    // Predicated region
    $region6: #{tpu_custom_call.1} parent=1 // pred_check
      _
    $region7: #{tpu_custom_call.1} parent=1 // pred_check_branch
      %15 = sbr.rel (0) target = $region9
    $region8: #{tpu_custom_call.1} parent=1 // pred_region
      _
    $region9: #{tpu_custom_call.1} parent=1 // pred_fallthru
      _
    // Predicated region
    $region10: #{tpu_custom_call.1} parent=1 // pred_check
      _
    $region11: #{tpu_custom_call.1} parent=1 // pred_check_branch
      %17 = sbr.rel (0) target = $region13
    $region12: #{tpu_custom_call.1} parent=1 // pred_region
      _
    $region13: #{tpu_custom_call.1} parent=1 // pred_fallthru
      _
    // Predicated region
    $region14: #{tpu_custom_call.1} parent=1 // pred_check
      _
    $region15: #{tpu_custom_call.1} parent=1 // pred_check_branch
      %19 = sbr.rel (0) target = $region17
    $region16: #{tpu_custom_call.1} parent=1 // pred_region
      _
    $region17: #{tpu_custom_call.1} parent=1 // pred_fallthru
      _
    %v20 = vld [vmem:[%s1] sm:$0xff]
    %v21 = vld [vmem:[%s1 + $0x8] sm:$0xff]
    %v22 = vld [vmem:[%s1 + $0x10] sm:$0xff]
    %v23 = vld [vmem:[%s1 + $0x18] sm:$0xff]
    %v24 = vld [vmem:[%s1 + $0x20] sm:$0xff]
    %v25 = vld [vmem:[%s1 + $0x28] sm:$0xff]
    %v26 = vld [vmem:[%s1 + $0x30] sm:$0xff]
    %v27 = vld [vmem:[%s1 + $0x38] sm:$0xff]
    %v28 = vld [vmem:[%s1 + $0x40] sm:$0xff]
    %v29 = vld [vmem:[%s1 + $0x48] sm:$0xff]
    %v30 = vld [vmem:[%s1 + $0x50] sm:$0xff]
    %v31 = vld [vmem:[%s1 + $0x58] sm:$0xff]
    %v32 = vld [vmem:[%s1 + $0x60] sm:$0xff]
    %v33 = vld [vmem:[%s1 + $0x68] sm:$0xff]
    %v34 = vld [vmem:[%s1 + $0x70] sm:$0xff]
    %v35 = vld [vmem:[%s1 + $0x78] sm:$0xff]
    %p36 = scmp.eq.s32.totalorder 0, 0
    // Predicated region
    $region18: #{tpu_custom_call.1} parent=1 // pred_check
      %p37 = pneg %p36
    $region19: #{tpu_custom_call.1} parent=1 // pred_check_branch
      %39 = sbr.rel (%p37) target = $region21
    $region20: #{tpu_custom_call.1} parent=1 // pred_region
      %40 = vst [vmem:[#allocation5] sm:$0x1] 0.0
      %v41 = vmul.f32 %v20, %v20
      %v42 = vmul.f32 %v21, %v21
      %v43 = vmul.f32 %v22, %v22
      %v44 = vmul.f32 %v23, %v23
      %v45 = vmul.f32 %v24, %v24
      %v46 = vmul.f32 %v25, %v25
      %v47 = vmul.f32 %v26, %v26
      %v48 = vmul.f32 %v27, %v27
      %v49 = vmul.f32 %v28, %v28
      %v50 = vmul.f32 %v29, %v29
      %v51 = vmul.f32 %v30, %v30
      %v52 = vmul.f32 %v31, %v31
      %v53 = vmul.f32 %v32, %v32
      %v54 = vmul.f32 %v33, %v33
      %v55 = vmul.f32 %v34, %v34
      %v56 = vmul.f32 %v35, %v35
      %vm57 = vcmask 261120
      %v58 = vsel %vm57, %v41, 0.0
      %59 = vadd.xlane.f32.xlu0 %v58
      %v60 = vpop.xlane.xlu0 %59
      %v61 = vsel %vm57, %v42, 0.0
      %62 = vadd.xlane.f32.xlu0 %v61
      %v63 = vpop.xlane.xlu0 %62
      %v64 = vsel %vm57, %v43, 0.0
      %65 = vadd.xlane.f32.xlu0 %v64
      %v66 = vpop.xlane.xlu0 %65
      %v67 = vsel %vm57, %v44, 0.0
      %68 = vadd.xlane.f32.xlu0 %v67
      %v69 = vpop.xlane.xlu0 %68
      %v70 = vsel %vm57, %v45, 0.0
      %71 = vadd.xlane.f32.xlu0 %v70
      %v72 = vpop.xlane.xlu0 %71
      %v73 = vsel %vm57, %v46, 0.0
      %74 = vadd.xlane.f32.xlu0 %v73
      %v75 = vpop.xlane.xlu0 %74
      %v76 = vsel %vm57, %v47, 0.0
      %77 = vadd.xlane.f32.xlu0 %v76
      %v78 = vpop.xlane.xlu0 %77
      %v79 = vsel %vm57, %v48, 0.0
      %80 = vadd.xlane.f32.xlu0 %v79
      %v81 = vpop.xlane.xlu0 %80
      %v82 = vsel %vm57, %v49, 0.0
      %83 = vadd.xlane.f32.xlu0 %v82
      %v84 = vpop.xlane.xlu0 %83
      %v85 = vsel %vm57, %v50, 0.0
      %86 = vadd.xlane.f32.xlu0 %v85
      %v87 = vpop.xlane.xlu0 %86
      %v88 = vsel %vm57, %v51, 0.0
      %89 = vadd.xlane.f32.xlu0 %v88
      %v90 = vpop.xlane.xlu0 %89
      %v91 = vsel %vm57, %v52, 0.0
      %92 = vadd.xlane.f32.xlu0 %v91
      %v93 = vpop.xlane.xlu0 %92
      %v94 = vsel %vm57, %v53, 0.0
      %95 = vadd.xlane.f32.xlu0 %v94
      %v96 = vpop.xlane.xlu0 %95
      %v97 = vsel %vm57, %v54, 0.0
      %98 = vadd.xlane.f32.xlu0 %v97
      %v99 = vpop.xlane.xlu0 %98
      %v100 = vsel %vm57, %v55, 0.0
      %101 = vadd.xlane.f32.xlu0 %v100
      %v102 = vpop.xlane.xlu0 %101
      %v103 = vsel %vm57, %v56, 0.0
      %104 = vadd.xlane.f32.xlu0 %v103
      %v105 = vpop.xlane.xlu0 %104
      %vm106 = vcmask 7168
      %107 = vst.msk [vmem:[#allocation2] sm:$0xff] %vm106, %v60
      %108 = vst.msk [vmem:[#allocation2 + $0x8] sm:$0xff] %vm106, %v63
      %109 = vst.msk [vmem:[#allocation2 + $0x10] sm:$0xff] %vm106, %v66
      %110 = vst.msk [vmem:[#allocation2 + $0x18] sm:$0xff] %vm106, %v69
      %111 = vst.msk [vmem:[#allocation2 + $0x20] sm:$0xff] %vm106, %v72
      %112 = vst.msk [vmem:[#allocation2 + $0x28] sm:$0xff] %vm106, %v75
      %113 = vst.msk [vmem:[#allocation2 + $0x30] sm:$0xff] %vm106, %v78
      %114 = vst.msk [vmem:[#allocation2 + $0x38] sm:$0xff] %vm106, %v81
      %115 = vst.msk [vmem:[#allocation2 + $0x40] sm:$0xff] %vm106, %v84
      %116 = vst.msk [vmem:[#allocation2 + $0x48] sm:$0xff] %vm106, %v87
      %117 = vst.msk [vmem:[#allocation2 + $0x50] sm:$0xff] %vm106, %v90
      %118 = vst.msk [vmem:[#allocation2 + $0x58] sm:$0xff] %vm106, %v93
      %119 = vst.msk [vmem:[#allocation2 + $0x60] sm:$0xff] %vm106, %v96
      %120 = vst.msk [vmem:[#allocation2 + $0x68] sm:$0xff] %vm106, %v99
      %121 = vst.msk [vmem:[#allocation2 + $0x70] sm:$0xff] %vm106, %v102
      %122 = vst.msk [vmem:[#allocation2 + $0x78] sm:$0xff] %vm106, %v105
    $region21: #{tpu_custom_call.1} parent=1 // pred_fallthru
      _
    %v123 = vld [vmem:[%s2] sm:$0xff]
    %v124 = vld [vmem:[%s2 + $0x8] sm:$0xff]
    %v125 = vld [vmem:[%s2 + $0x10] sm:$0xff]
    %v126 = vld [vmem:[%s2 + $0x18] sm:$0xff]
    %v127 = vld [vmem:[%s2 + $0x20] sm:$0xff]
    %v128 = vld [vmem:[%s2 + $0x28] sm:$0xff]
    %v129 = vld [vmem:[%s2 + $0x30] sm:$0xff]
    %v130 = vld [vmem:[%s2 + $0x38] sm:$0xff]
    %v131 = vld [vmem:[%s2 + $0x40] sm:$0xff]
    %v132 = vld [vmem:[%s2 + $0x48] sm:$0xff]
    %v133 = vld [vmem:[%s2 + $0x50] sm:$0xff]
    %v134 = vld [vmem:[%s2 + $0x58] sm:$0xff]
    %v135 = vld [vmem:[%s2 + $0x60] sm:$0xff]
    %v136 = vld [vmem:[%s2 + $0x68] sm:$0xff]
    %v137 = vld [vmem:[%s2 + $0x70] sm:$0xff]
    %v138 = vld [vmem:[%s2 + $0x78] sm:$0xff]
    %vm139 = vcmask 261120
    %v141 = vsel %vm139, %v20, 0
    %v144 = vsel %vm139, %v21, 0
    %v147 = vsel %vm139, %v22, 0
    %v150 = vsel %vm139, %v23, 0
    %v153 = vsel %vm139, %v24, 0
    %v156 = vsel %vm139, %v25, 0
    %v159 = vsel %vm139, %v26, 0
    %v162 = vsel %vm139, %v27, 0
    %v165 = vsel %vm139, %v28, 0
    %v168 = vsel %vm139, %v29, 0
    %v171 = vsel %vm139, %v30, 0
    %v174 = vsel %vm139, %v31, 0
    %v177 = vsel %vm139, %v32, 0
    %v180 = vsel %vm139, %v33, 0
    %v183 = vsel %vm139, %v34, 0
    %v186 = vsel %vm139, %v35, 0
    %v189 = vsel %vm139, %v123, 0
    %v192 = vsel %vm139, %v124, 0
    %v195 = vsel %vm139, %v125, 0
    %v198 = vsel %vm139, %v126, 0
    %v201 = vsel %vm139, %v127, 0
    %v204 = vsel %vm139, %v128, 0
    %v207 = vsel %vm139, %v129, 0
    %v210 = vsel %vm139, %v130, 0
    %v213 = vsel %vm139, %v131, 0
    %v216 = vsel %vm139, %v132, 0
    %v219 = vsel %vm139, %v133, 0
    %v222 = vsel %vm139, %v134, 0
    %v225 = vsel %vm139, %v135, 0
    %v228 = vsel %vm139, %v136, 0
    %v231 = vsel %vm139, %v137, 0
    %v234 = vsel %vm139, %v138, 0
    %236 = vmatpush.xpose.msra.mxu0 %v234
    %237 = vmatpush.xpose.msra.mxu0 %v231
    %238 = vmatpush.xpose.msra.mxu0 %v228
    %239 = vmatpush.xpose.msra.mxu0 %v225
    %240 = vmatpush.xpose.msra.mxu0 %v222
    %241 = vmatpush.xpose.msra.mxu0 %v219
    %242 = vmatpush.xpose.msra.mxu0 %v216
    %243 = vmatpush.xpose.msra.mxu0 %v213
    %244 = vmatpush.xpose.msra.mxu0 %v210
    %245 = vmatpush.xpose.msra.mxu0 %v207
    %246 = vmatpush.xpose.msra.mxu0 %v204
    %247 = vmatpush.xpose.msra.mxu0 %v201
    %248 = vmatpush.xpose.msra.mxu0 %v198
    %249 = vmatpush.xpose.msra.mxu0 %v195
    %250 = vmatpush.xpose.msra.mxu0 %v192
    %251 = vmatpush.xpose.msra.mxu0 %v189
    %252 = vmatmul.f32.gmra.mxu0 %v141
    %v253 = vpop.f32.mrf.mxu0
    %v254 = vadd.f32 0.0, %v253
    %255 = vmatmul.f32.gmra.mxu0 %v144
    %v256 = vpop.f32.mrf.mxu0
    %v257 = vadd.f32 0.0, %v256
    %258 = vmatmul.f32.gmra.mxu0 %v147
    %v259 = vpop.f32.mrf.mxu0
    %v260 = vadd.f32 0.0, %v259
    %261 = vmatmul.f32.gmra.mxu0 %v150
    %v262 = vpop.f32.mrf.mxu0
    %v263 = vadd.f32 0.0, %v262
    %264 = vmatmul.f32.gmra.mxu0 %v153
    %v265 = vpop.f32.mrf.mxu0
    %v266 = vadd.f32 0.0, %v265
    %267 = vmatmul.f32.gmra.mxu0 %v156
    %v268 = vpop.f32.mrf.mxu0
    %v269 = vadd.f32 0.0, %v268
    %270 = vmatmul.f32.gmra.mxu0 %v159
    %v271 = vpop.f32.mrf.mxu0
    %v272 = vadd.f32 0.0, %v271
    %273 = vmatmul.f32.gmra.mxu0 %v162
    %v274 = vpop.f32.mrf.mxu0
    %v275 = vadd.f32 0.0, %v274
    %276 = vmatmul.f32.gmra.mxu0 %v165
    %v277 = vpop.f32.mrf.mxu0
    %v278 = vadd.f32 0.0, %v277
    %279 = vmatmul.f32.gmra.mxu0 %v168
    %v280 = vpop.f32.mrf.mxu0
    %v281 = vadd.f32 0.0, %v280
    %282 = vmatmul.f32.gmra.mxu0 %v171
    %v283 = vpop.f32.mrf.mxu0
    %v284 = vadd.f32 0.0, %v283
    %285 = vmatmul.f32.gmra.mxu0 %v174
    %v286 = vpop.f32.mrf.mxu0
    %v287 = vadd.f32 0.0, %v286
    %288 = vmatmul.f32.gmra.mxu0 %v177
    %v289 = vpop.f32.mrf.mxu0
    %v290 = vadd.f32 0.0, %v289
    %291 = vmatmul.f32.gmra.mxu0 %v180
    %v292 = vpop.f32.mrf.mxu0
    %v293 = vadd.f32 0.0, %v292
    %294 = vmatmul.f32.gmra.mxu0 %v183
    %v295 = vpop.f32.mrf.mxu0
    %v296 = vadd.f32 0.0, %v295
    %297 = vmatmul.f32.gmra.mxu0 %v186
    %v298 = vpop.f32.mrf.mxu0
    %v299 = vadd.f32 0.0, %v298
    %300 = vdwg.mxu0
    %v301 = vld [vmem:[#allocation2] sm:$0xff]
    %v302 = vld [vmem:[#allocation2 + $0x8] sm:$0xff]
    %v303 = vld [vmem:[#allocation2 + $0x10] sm:$0xff]
    %v304 = vld [vmem:[#allocation2 + $0x18] sm:$0xff]
    %v305 = vld [vmem:[#allocation2 + $0x20] sm:$0xff]
    %v306 = vld [vmem:[#allocation2 + $0x28] sm:$0xff]
    %v307 = vld [vmem:[#allocation2 + $0x30] sm:$0xff]
    %v308 = vld [vmem:[#allocation2 + $0x38] sm:$0xff]
    %v309 = vld [vmem:[#allocation2 + $0x40] sm:$0xff]
    %v310 = vld [vmem:[#allocation2 + $0x48] sm:$0xff]
    %v311 = vld [vmem:[#allocation2 + $0x50] sm:$0xff]
    %v312 = vld [vmem:[#allocation2 + $0x58] sm:$0xff]
    %v313 = vld [vmem:[#allocation2 + $0x60] sm:$0xff]
    %v314 = vld [vmem:[#allocation2 + $0x68] sm:$0xff]
    %v315 = vld [vmem:[#allocation2 + $0x70] sm:$0xff]
    %v316 = vld [vmem:[#allocation2 + $0x78] sm:$0xff]
    %v317 = vld [vmem:[%s4] sm:$0x1]
    %319 = vset.pattern.permute.xlu0 0
    %320 = vperm.xlu0 %319, %v301
    %v321 = vpop.permute.xlu0 %320
    %324 = vset.pattern.permute.xlu0 0
    %325 = vperm.xlu0 %324, %v302
    %v326 = vpop.permute.xlu0 %325
    %329 = vset.pattern.permute.xlu0 0
    %330 = vperm.xlu0 %329, %v303
    %v331 = vpop.permute.xlu0 %330
    %334 = vset.pattern.permute.xlu0 0
    %335 = vperm.xlu0 %334, %v304
    %v336 = vpop.permute.xlu0 %335
    %339 = vset.pattern.permute.xlu0 0
    %340 = vperm.xlu0 %339, %v305
    %v341 = vpop.permute.xlu0 %340
    %344 = vset.pattern.permute.xlu0 0
    %345 = vperm.xlu0 %344, %v306
    %v346 = vpop.permute.xlu0 %345
    %349 = vset.pattern.permute.xlu0 0
    %350 = vperm.xlu0 %349, %v307
    %v351 = vpop.permute.xlu0 %350
    %354 = vset.pattern.permute.xlu0 0
    %355 = vperm.xlu0 %354, %v308
    %v356 = vpop.permute.xlu0 %355
    %359 = vset.pattern.permute.xlu0 0
    %360 = vperm.xlu0 %359, %v309
    %v361 = vpop.permute.xlu0 %360
    %364 = vset.pattern.permute.xlu0 0
    %365 = vperm.xlu0 %364, %v310
    %v366 = vpop.permute.xlu0 %365
    %369 = vset.pattern.permute.xlu0 0
    %370 = vperm.xlu0 %369, %v311
    %v371 = vpop.permute.xlu0 %370
    %374 = vset.pattern.permute.xlu0 0
    %375 = vperm.xlu0 %374, %v312
    %v376 = vpop.permute.xlu0 %375
    %379 = vset.pattern.permute.xlu0 0
    %380 = vperm.xlu0 %379, %v313
    %v381 = vpop.permute.xlu0 %380
    %384 = vset.pattern.permute.xlu0 0
    %385 = vperm.xlu0 %384, %v314
    %v386 = vpop.permute.xlu0 %385
    %389 = vset.pattern.permute.xlu0 0
    %390 = vperm.xlu0 %389, %v315
    %v391 = vpop.permute.xlu0 %390
    %394 = vset.pattern.permute.xlu0 0
    %395 = vperm.xlu0 %394, %v316
    %v396 = vpop.permute.xlu0 %395
    %v399 = vperm.slane %v317, 0
    %v401 = vadd.f32 %v321, %v399
    %v402 = vadd.f32 %v326, %v399
    %v403 = vadd.f32 %v331, %v399
    %v404 = vadd.f32 %v336, %v399
    %v405 = vadd.f32 %v341, %v399
    %v406 = vadd.f32 %v346, %v399
    %v407 = vadd.f32 %v351, %v399
    %v408 = vadd.f32 %v356, %v399
    %v409 = vadd.f32 %v361, %v399
    %v410 = vadd.f32 %v366, %v399
    %v411 = vadd.f32 %v371, %v399
    %v412 = vadd.f32 %v376, %v399
    %v413 = vadd.f32 %v381, %v399
    %v414 = vadd.f32 %v386, %v399
    %v415 = vadd.f32 %v391, %v399
    %v416 = vadd.f32 %v396, %v399
    %v417 = vmul.f32 %v254, 2.0
    %v418 = vmul.f32 %v257, 2.0
    %v419 = vmul.f32 %v260, 2.0
    %v420 = vmul.f32 %v263, 2.0
    %v421 = vmul.f32 %v266, 2.0
    %v422 = vmul.f32 %v269, 2.0
    %v423 = vmul.f32 %v272, 2.0
    %v424 = vmul.f32 %v275, 2.0
    %v425 = vmul.f32 %v278, 2.0
    %v426 = vmul.f32 %v281, 2.0
    %v427 = vmul.f32 %v284, 2.0
    %v428 = vmul.f32 %v287, 2.0
    %v429 = vmul.f32 %v290, 2.0
    %v430 = vmul.f32 %v293, 2.0
    %v431 = vmul.f32 %v296, 2.0
    %v432 = vmul.f32 %v299, 2.0
    %v433 = vsub.f32 %v401, %v417
    %v434 = vsub.f32 %v402, %v418
    %v435 = vsub.f32 %v403, %v419
    %v436 = vsub.f32 %v404, %v420
    %v437 = vsub.f32 %v405, %v421
    %v438 = vsub.f32 %v406, %v422
    %v439 = vsub.f32 %v407, %v423
    %v440 = vsub.f32 %v408, %v424
    %v441 = vsub.f32 %v409, %v425
    %v442 = vsub.f32 %v410, %v426
    %v443 = vsub.f32 %v411, %v427
    %v444 = vsub.f32 %v412, %v428
    %v445 = vsub.f32 %v413, %v429
    %v446 = vsub.f32 %v414, %v430
    %v447 = vsub.f32 %v415, %v431
    %v448 = vsub.f32 %v416, %v432
    %s449 = sld [smem:[#allocation4]]
    %v450 = vstv %s449
    %v451 = vmul.f32 %v433, %v450
    %v452 = vmul.f32 %v434, %v450
    %v453 = vmul.f32 %v435, %v450
    %v454 = vmul.f32 %v436, %v450
    %v455 = vmul.f32 %v437, %v450
    %v456 = vmul.f32 %v438, %v450
    %v457 = vmul.f32 %v439, %v450
    %v458 = vmul.f32 %v440, %v450
    %v459 = vmul.f32 %v441, %v450
    %v460 = vmul.f32 %v442, %v450
    %v461 = vmul.f32 %v443, %v450
    %v462 = vmul.f32 %v444, %v450
    %v463 = vmul.f32 %v445, %v450
    %v464 = vmul.f32 %v446, %v450
    %v465 = vmul.f32 %v447, %v450
    %v466 = vmul.f32 %v448, %v450
    %v467 = vmul.f32 %v451, 1.442695
    %v468 = vpow.pop %v467
    %v469 = vmul.f32 %v452, 1.442695
    %v470 = vpow.pop %v469
    %v471 = vmul.f32 %v453, 1.442695
    %v472 = vpow.pop %v471
    %v473 = vmul.f32 %v454, 1.442695
    %v474 = vpow.pop %v473
    %v475 = vmul.f32 %v455, 1.442695
    %v476 = vpow.pop %v475
    %v477 = vmul.f32 %v456, 1.442695
    %v478 = vpow.pop %v477
    %v479 = vmul.f32 %v457, 1.442695
    %v480 = vpow.pop %v479
    %v481 = vmul.f32 %v458, 1.442695
    %v482 = vpow.pop %v481
    %v483 = vmul.f32 %v459, 1.442695
    %v484 = vpow.pop %v483
    %v485 = vmul.f32 %v460, 1.442695
    %v486 = vpow.pop %v485
    %v487 = vmul.f32 %v461, 1.442695
    %v488 = vpow.pop %v487
    %v489 = vmul.f32 %v462, 1.442695
    %v490 = vpow.pop %v489
    %v491 = vmul.f32 %v463, 1.442695
    %v492 = vpow.pop %v491
    %v493 = vmul.f32 %v464, 1.442695
    %v494 = vpow.pop %v493
    %v495 = vmul.f32 %v465, 1.442695
    %v496 = vpow.pop %v495
    %v497 = vmul.f32 %v466, 1.442695
    %v498 = vpow.pop %v497
    %v499 = vld [vmem:[#allocation5] sm:$0x1]
    %v500 = vld [vmem:[%s3] sm:$0x1]
    %501 = vmatpush.xpose.msra.mxu0 %v498
    %502 = vmatpush.xpose.msra.mxu0 %v496
    %503 = vmatpush.xpose.msra.mxu0 %v494
    %504 = vmatpush.xpose.msra.mxu0 %v492
    %505 = vmatpush.xpose.msra.mxu0 %v490
    %506 = vmatpush.xpose.msra.mxu0 %v488
    %507 = vmatpush.xpose.msra.mxu0 %v486
    %508 = vmatpush.xpose.msra.mxu0 %v484
    %509 = vmatpush.xpose.msra.mxu0 %v482
    %510 = vmatpush.xpose.msra.mxu0 %v480
    %511 = vmatpush.xpose.msra.mxu0 %v478
    %512 = vmatpush.xpose.msra.mxu0 %v476
    %513 = vmatpush.xpose.msra.mxu0 %v474
    %514 = vmatpush.xpose.msra.mxu0 %v472
    %515 = vmatpush.xpose.msra.mxu0 %v470
    %516 = vmatpush.xpose.msra.mxu0 %v468
    %517 = vmatmul.f32.gmra.mxu0 %v500
    %v518 = vpop.f32.mrf.mxu0
    %v519 = vadd.f32 0.0, %v518
    %520 = vdwg.mxu0
    %v521 = vadd.f32 %v499, %v519
    %522 = vst [vmem:[#allocation5] sm:$0x1] %v521
    // Predicated region
    $region22: #{tpu_custom_call.1} parent=1 // pred_check
      _
    $region23: #{tpu_custom_call.1} parent=1 // pred_check_branch
      %524 = sbr.rel (0) target = $region25
    $region24: #{tpu_custom_call.1} parent=1 // pred_region
      %526 = vsyncadd [#allocation6], 0
      %s528 = sshll.u32 [#allocation5], 4
      %s529 = int_to_ptr.vmem [resolvable:$true] %s528
      %s530 = sshll.u32 %s5, 4
      %s531 = int_to_ptr.hbm [resolvable:$true] %s530
      %533 = dma.vmem_to_hbm [thread:$0]  %s529, 16, %s531, [#allocation6]
    $region25: #{tpu_custom_call.1} parent=1 // pred_fallthru
      _
    // Predicated region
    $region26: #{tpu_custom_call.1} parent=1 // pred_check
      _
    $region27: #{tpu_custom_call.1} parent=1 // pred_check_branch
      %535 = sbr.rel (0) target = $region29
    $region28: #{tpu_custom_call.1} parent=1 // pred_region
      %537 = dma.done [#allocation6], 16
    $region29: #{tpu_custom_call.1} parent=1 // pred_fallthru
      _
    %538 = vsyncpa [#allocation6], 1

</llo_original>
